<compile_context>
chip_gen: v6e
topology: v6e:2x2x1
jax: 0.10.0
libtpu: 0.0.40
codegen_flags: <defaults>
</compile_context>

<pallas_src>
import jax
import jax.numpy as jnp
from jax.experimental import pallas as pl
from jax.experimental.pallas import tpu as pltpu


# -----------------------------------------------------------------------------
# Helpers: generation-aware VMEM budget and tile selection.
# -----------------------------------------------------------------------------
def _round_up(x, m):
    return (x + m - 1) // m * m


def _vmem_limit_bytes():
    """Scoped-VMEM limit with headroom: ~48 MiB on v7x (64 MiB/TC), ~100 MiB on v5e/v6e."""
    try:
        cap = pltpu.get_tpu_info().vmem_capacity_bytes
    except Exception:
        cap = 64 * 1024 * 1024  # be conservative: assume the smallest (v7x per-TC)
    if cap <= 64 * 1024 * 1024:
        return 48 * 1024 * 1024
    return 100 * 1024 * 1024


def _pick_vocab_tile(V, E, B, budget_bytes):
    """Largest lane-aligned output-vocab tile whose working set fits the budget."""
    vpad = _round_up(V, 128)
    for tn in (4096, 2048, 1024, 512, 256, 128):
        if tn > vpad:
            continue
        # double-buffered bf16 W2 tile + double-buffered f32 out tile + resident bf16 hidden
        need = 2 * E * tn * 2 + 2 * B * tn * 4 + B * E * 2
        if need <= budget_bytes:
            return tn
    return 128


# -----------------------------------------------------------------------------
# Second layer: hidden [B, E] @ W2 [E, V], tiled over the output vocab.
# Shared by the one-hot (skip-gram) path and the dense path.
# -----------------------------------------------------------------------------
def _hidden_w2_kernel(h_ref, w2_ref, out_ref):
    # [B, E] @ [E, TN] on the MXU: bf16 operands, f32 accumulation.
    out_ref[...] = jnp.dot(
        h_ref[...], w2_ref[...], preferred_element_type=jnp.float32
    ).astype(out_ref.dtype)


def _hidden_times_w2(hidden_bf16, w2):
    B, E = hidden_bf16.shape
    E2, V = w2.shape
    assert E2 == E

    limit = _vmem_limit_bytes()
    tn = _pick_vocab_tile(V, E, B, budget_bytes=limit // 2)
    Vp = _round_up(V, tn)

    w2_bf = w2.astype(jnp.bfloat16)
    if Vp != V:
        # Ragged vocab: zero-pad the last tile, slice the output afterwards.
        w2_bf = jnp.pad(w2_bf, ((0, 0), (0, Vp - V)))

    cost = pl.CostEstimate(
        flops=2 * B * E * Vp,
        transcendentals=0,
        bytes_accessed=B * E * 2 + E * Vp * 2 + B * Vp * 4,
    )
    out = pl.pallas_call(
        _hidden_w2_kernel,
        out_shape=jax.ShapeDtypeStruct((B, Vp), jnp.float32),
        grid_spec=pltpu.PrefetchScalarGridSpec(
            num_scalar_prefetch=0,
            grid=(Vp // tn,),
            in_specs=[
                pl.BlockSpec((B, E), lambda j: (0, 0)),    # hidden resident in VMEM
                pl.BlockSpec((E, tn), lambda j: (0, j)),   # lane-dense bf16 W2 vocab tile
            ],
            out_specs=pl.BlockSpec((B, tn), lambda j: (0, j)),
        ),
        compiler_params=pltpu.CompilerParams(
            # Independent output-vocab tiles -> both TensorCores on v7x split them.
            dimension_semantics=("parallel",),
            vmem_limit_bytes=limit,
        ),
        cost_estimate=cost,
    )(hidden_bf16, w2_bf)
    return out[:, :V] if Vp != V else out


# -----------------------------------------------------------------------------
# First layer (dense-X path only): hidden = X @ W1, reduction tiled over V.
# -----------------------------------------------------------------------------
def _xw1_kernel(x_ref, w1_ref, h_ref, acc_ref):
    @pl.when(pl.program_id(0) == 0)
    def _():
        acc_ref[...] = jnp.zeros_like(acc_ref)

    acc_ref[...] += jnp.dot(
        x_ref[...], w1_ref[...], preferred_element_type=jnp.float32
    )

    @pl.when(pl.program_id(0) == pl.num_programs(0) - 1)
    def _():
        h_ref[...] = acc_ref[...].astype(h_ref.dtype)


def _x_times_w1(x, w1):
    B, V = x.shape
    Vw, E = w1.shape
    assert Vw == V

    limit = _vmem_limit_bytes()
    vpad = _round_up(V, 128)
    tk = 128
    for cand in (2048, 1024, 512, 256, 128):
        if cand > vpad:
            continue
        need = 2 * B * cand * 2 + 2 * cand * E * 2 + 2 * B * E * 4
        if need <= limit // 2:
            tk = cand
            break
    Vp = _round_up(V, tk)

    x_bf = x.astype(jnp.bfloat16)
    w1_bf = w1.astype(jnp.bfloat16)
    if Vp != V:
        x_bf = jnp.pad(x_bf, ((0, 0), (0, Vp - V)))
        w1_bf = jnp.pad(w1_bf, ((0, Vp - V), (0, 0)))

    cost = pl.CostEstimate(
        flops=2 * B * Vp * E,
        transcendentals=0,
        bytes_accessed=B * Vp * 2 + Vp * E * 2 + B * E * 2,
    )
    return pl.pallas_call(
        _xw1_kernel,
        out_shape=jax.ShapeDtypeStruct((B, E), jnp.bfloat16),
        grid_spec=pltpu.PrefetchScalarGridSpec(
            num_scalar_prefetch=0,
            grid=(Vp // tk,),
            in_specs=[
                pl.BlockSpec((B, tk), lambda k: (0, k)),   # X vocab slab
                pl.BlockSpec((tk, E), lambda k: (k, 0)),   # W1 vocab slab
            ],
            out_specs=pl.BlockSpec((B, E), lambda k: (0, 0)),  # resident across reduction
            scratch_shapes=[pltpu.VMEM((B, E), jnp.float32)],
        ),
        compiler_params=pltpu.CompilerParams(
            dimension_semantics=("arbitrary",),  # reduction axis with carried accumulator
            vmem_limit_bytes=limit,
        ),
        cost_estimate=cost,
    )(x_bf, w1_bf)


# -----------------------------------------------------------------------------
# Public entry points (forward semantics of the PyTorch module).
# -----------------------------------------------------------------------------
def word2vec_forward_onehot(idx, w1, w2):
    """output[b, :] = w1[idx[b], :] @ w2  ==  one_hot(idx) @ w1 @ w2 (skip-gram fast path)."""
    V, E = w1.shape
    assert w2.shape == (E, V)
    # Embedding gather hoisted out of the kernel: done ONCE here (O(B*E) bytes)
    # instead of re-DMA-ing the same B rows for every output-vocab tile.
    hidden = jnp.take(w1.astype(jnp.bfloat16), idx.astype(jnp.int32), axis=0)
    return _hidden_times_w2(hidden, w2)


def word2vec_forward_dense(x, w1, w2):
    """Exact PyTorch forward for arbitrary dense X: (X @ W1) @ W2."""
    B, V = x.shape
    assert w1.shape[0] == V and w2.shape == (w1.shape[1], V)
    hidden = _x_times_w1(x, w1)          # reduction-tiled first matmul (scales to large V)
    return _hidden_times_w2(hidden, w2)  # "parallel" vocab-tiled second matmul


if __name__ == "__main__":
    # Small shapes consistent with the module.  E stays lane-dense (multiple of
    # 128); V is deliberately NOT a multiple of 128 to exercise the ragged-tile
    # padding path.  Real workloads should stack >=128-512 center words per call
    # to fill MXU rows and amortize the W2 stream.
    batch = 64
    voc_size = 1000
    embedding_size = 128

    key = jax.random.PRNGKey(0)
    k_idx, k_w1, k_w2 = jax.random.split(key, 3)

    # nn.Linear weights, stored transposed for x @ W.
    w1 = jax.random.normal(k_w1, (voc_size, embedding_size), dtype=jnp.float32) * 0.1
    w2 = jax.random.normal(k_w2, (embedding_size, voc_size), dtype=jnp.float32) * 0.1

    # Skip-gram center words and their one-hot encoding.
    idx = jax.random.randint(k_idx, (batch,), 0, voc_size, dtype=jnp.int32)
    x = jax.nn.one_hot(idx, voc_size, dtype=jnp.float32)

    out_gather = word2vec_forward_onehot(idx, w1, w2)
    out_dense = word2vec_forward_dense(x, w1, w2)
    out_gather, out_dense = jax.block_until_ready((out_gather, out_dense))

    # JAX reference with matching numerics (bf16 weights, f32 accumulation).
    w1_bf = w1.astype(jnp.bfloat16)
    w2_bf = w2.astype(jnp.bfloat16)
    h_ref = jnp.take(w1_bf, idx, axis=0)
    ref = jnp.dot(h_ref, w2_bf, preferred_element_type=jnp.float32)

    assert out_gather.shape == (batch, voc_size)
    assert out_dense.shape == (batch, voc_size)
    assert jnp.allclose(out_gather, ref, atol=2e-2, rtol=2e-2)
    assert jnp.allclose(out_dense, ref, atol=2e-2, rtol=2e-2)
    assert jnp.allclose(out_gather, out_dense, atol=2e-2, rtol=2e-2)

    print("KERNEL_OK")
</pallas_src>

<mosaic_0001>
module attributes {stable_mosaic.version = 11 : i64} {
  func.func @_hidden_w2_kernel(%arg0: i32, %arg1: memref<64x128xbf16, #tpu.memory_space<vmem>>, %arg2: memref<128x1024xbf16, #tpu.memory_space<vmem>>, %arg3: memref<64x1024xf32, #tpu.memory_space<vmem>>) attributes {dimension_semantics = [#tpu.dimension_semantics<parallel>], iteration_bounds = array<i64: 1>, scalar_prefetch = 0 : i64, scratch_operands = 0 : i64, tpu.core_type = #tpu.core_type<tc>, window_params = [{pipeline_mode = #tpu.pipeline_mode<synchronous>, transform_indices = @transform_0, window_bounds = array<i64: 64, 128>}, {transform_indices = @transform_1, window_bounds = array<i64: 128, 1024>}, {transform_indices = @transform_2, window_bounds = array<i64: 64, 1024>}]} {
    %c0 = arith.constant 0 : index
    %c0_0 = arith.constant 0 : index
    %0 = vector.load %arg1[%c0, %c0_0] : memref<64x128xbf16, #tpu.memory_space<vmem>>, vector<64x128xbf16>
    %c0_1 = arith.constant 0 : index
    %c0_2 = arith.constant 0 : index
    %1 = vector.load %arg2[%c0_1, %c0_2] : memref<128x1024xbf16, #tpu.memory_space<vmem>>, vector<128x1024xbf16>
    %cst = arith.constant dense<0.000000e+00> : vector<64x1024xf32>
    %2 = tpu.matmul %0, %1, %cst {dimension_numbers = #tpu.dot_dimension_numbers<[1], [0], [0], [1], [0, 0, 1, 1], [], []>} : vector<64x128xbf16>, vector<128x1024xbf16>, vector<64x1024xf32> -> vector<64x1024xf32>
    %c0_3 = arith.constant 0 : index
    %c0_4 = arith.constant 0 : index
    %3 = vector.load %arg3[%c0_3, %c0_4] : memref<64x1024xf32, #tpu.memory_space<vmem>>, vector<64x1024xf32>
    tpu.vector_store %arg3[%c0_3, %c0_4], %2 {strides = array<i32>} : memref<64x1024xf32, #tpu.memory_space<vmem>>, vector<64x1024xf32>,
    return
  }
  func.func @transform_0(%arg0: i32) -> (i32, i32) {
    %c0_i32 = arith.constant 0 : i32
    %c0_i32_0 = arith.constant 0 : i32
    %c0_i32_1 = arith.constant 0 : i32
    return %c0_i32, %c0_i32_0 : i32, i32
  }
  func.func @transform_1(%arg0: i32) -> (i32, i32) {
    %c0_i32 = arith.constant 0 : i32
    %c0_i32_0 = arith.constant 0 : i32
    return %c0_i32, %arg0 : i32, i32
  }
  func.func @transform_2(%arg0: i32) -> (i32, i32) {
    %c0_i32 = arith.constant 0 : i32
    %c0_i32_0 = arith.constant 0 : i32
    return %c0_i32, %arg0 : i32, i32
  }
}

</mosaic_0001>

<llo_original>
// kernel: tpu_custom_call.1
$region0: #{tpu_custom_call.1}
  #allocation0 [shape = 'u32[]', space=smem, size = 0x4, offset = 0x4, fixed_abs, tag = 'smem constant byte address 0x4 - core index']
  #allocation1 [shape = 'u32[144,128]{1,0:T(1,128)}', space=vmem, size = 0x12000, scoped, tag = 'internal scratch']
  %s0 = inlined_call_operand.hbm [shape: bf16[64,128], index: 0, kind: input, shape index: {}]
  %s1 = inlined_call_operand.hbm [shape: bf16[128,1024], index: 1, kind: input, shape index: {}]
  %s2 = inlined_call_operand.hbm [shape: f32[64,1024], index: 2, kind: output, shape index: {}]
  %s3 = sld [smem:[#allocation0]]
  $region26: #{tpu_custom_call.1} parent=0
    _
  %s5 = ssub.s32 1, %s3
  %s6 = scalar_select 0, %s5, %s3
  $region1: #{tpu_custom_call.1} parent=0
    #allocation2 [shape = 'u8[16384]{0}', space=vmem, size = 0x4000, scoped, tag = 'input window, operand 0, single buffered']
    #allocation3 [shape = 's32[1]{0}', space=sflag, size = 0x4, scoped, tag = 'scoped memory for tpu_custom_call.1']
    #allocation4 [shape = 's32[1]{0}', space=sflag, size = 0x4, scoped, tag = 'scoped memory for tpu_custom_call.1']
    #allocation5 [shape = 'u8[262144]{0}', space=vmem, size = 0x40000, scoped, tag = 'input window, operand 1, single buffered']
    #allocation6 [shape = 's32[1]{0}', space=sflag, size = 0x4, scoped, tag = 'scoped memory for tpu_custom_call.1']
    #allocation7 [shape = 'u8[262144]{0}', space=vmem, size = 0x40000, scoped, tag = 'output window, operand 0, single buffered']
    %7 = vsyncpa [#allocation3], 0
    %8 = vsyncpa [#allocation6], 0
    %9 = vsyncpa [#allocation4], 0
    // Predicated region
    $region2: #{tpu_custom_call.1} parent=1 // pred_check
      _
    $region3: #{tpu_custom_call.1} parent=1 // pred_check_branch
      %11 = sbr.rel (0) target = $region5
    $region4: #{tpu_custom_call.1} parent=1 // pred_region
      %s13 = ssub.s32 512, 512
      %14 = vsyncadd [#allocation3], %s13
      %s15 = sshll.u32 [#allocation2], 4
      %s16 = int_to_ptr.vmem [resolvable:$true] %s15
      %21 = dma.hbm_to_vmem [thread:$0]  %s0, 512, %s16, [#allocation3], 64, 64, 4
    $region5: #{tpu_custom_call.1} parent=1 // pred_fallthru
      _
    // Predicated region
    $region6: #{tpu_custom_call.1} parent=1 // pred_check
      _
    $region7: #{tpu_custom_call.1} parent=1 // pred_check_branch
      %23 = sbr.rel (0) target = $region9
    $region8: #{tpu_custom_call.1} parent=1 // pred_region
      %s25 = ssub.s32 8192, 8192
      %26 = vsyncadd [#allocation6], %s25
      %s27 = sshll.u32 [#allocation5], 4
      %s28 = int_to_ptr.vmem [resolvable:$true] %s27
      %33 = dma.hbm_to_vmem [thread:$0]  %s1, 8192, %s28, [#allocation6], 512, 512, 32
    $region9: #{tpu_custom_call.1} parent=1 // pred_fallthru
      _
    // Predicated region
    $region10: #{tpu_custom_call.1} parent=1 // pred_check
      _
    $region11: #{tpu_custom_call.1} parent=1 // pred_check_branch
      %35 = sbr.rel (0) target = $region13
    $region12: #{tpu_custom_call.1} parent=1 // pred_region
      %36 = dma.done [#allocation3], 512
    $region13: #{tpu_custom_call.1} parent=1 // pred_fallthru
      _
    // Predicated region
    $region14: #{tpu_custom_call.1} parent=1 // pred_check
      _
    $region15: #{tpu_custom_call.1} parent=1 // pred_check_branch
      %38 = sbr.rel (0) target = $region17
    $region16: #{tpu_custom_call.1} parent=1 // pred_region
      %39 = dma.done [#allocation6], 8192
    $region17: #{tpu_custom_call.1} parent=1 // pred_fallthru
      _
    %v41 = vld [vmem:[#allocation2] sm:$0xf]
    %v42 = vld [vmem:[#allocation2 + $0x4] sm:$0xf]
    %v43 = vld [vmem:[#allocation2 + $0x8] sm:$0xf]
    %v44 = vld [vmem:[#allocation2 + $0xc] sm:$0xf]
    %v45 = vld [vmem:[#allocation2 + $0x10] sm:$0xf]
    %v46 = vld [vmem:[#allocation2 + $0x14] sm:$0xf]
    %v47 = vld [vmem:[#allocation2 + $0x18] sm:$0xf]
    %v48 = vld [vmem:[#allocation2 + $0x1c] sm:$0xf]
    %v49 = vld [vmem:[#allocation5] sm:$0xff]
    %v50 = vld [vmem:[#allocation5 + $0x8] sm:$0xff]
    %v51 = vld [vmem:[#allocation5 + $0x10] sm:$0xff]
    %v52 = vld [vmem:[#allocation5 + $0x18] sm:$0xff]
    %v53 = vld [vmem:[#allocation5 + $0x20] sm:$0xff]
    %v54 = vld [vmem:[#allocation5 + $0x28] sm:$0xff]
    %v55 = vld [vmem:[#allocation5 + $0x30] sm:$0xff]
    %v56 = vld [vmem:[#allocation5 + $0x38] sm:$0xff]
    %v57 = vld [vmem:[#allocation5 + $0x40] sm:$0xff]
    %v58 = vld [vmem:[#allocation5 + $0x48] sm:$0xff]
    %v59 = vld [vmem:[#allocation5 + $0x50] sm:$0xff]
    %v60 = vld [vmem:[#allocation5 + $0x58] sm:$0xff]
    %v61 = vld [vmem:[#allocation5 + $0x60] sm:$0xff]
    %v62 = vld [vmem:[#allocation5 + $0x68] sm:$0xff]
    %v63 = vld [vmem:[#allocation5 + $0x70] sm:$0xff]
    %v64 = vld [vmem:[#allocation5 + $0x78] sm:$0xff]
    %v65 = vld [vmem:[#allocation5 + $0x80] sm:$0xff]
    %v66 = vld [vmem:[#allocation5 + $0x88] sm:$0xff]
    %v67 = vld [vmem:[#allocation5 + $0x90] sm:$0xff]
    %v68 = vld [vmem:[#allocation5 + $0x98] sm:$0xff]
    %v69 = vld [vmem:[#allocation5 + $0xa0] sm:$0xff]
    %v70 = vld [vmem:[#allocation5 + $0xa8] sm:$0xff]
    %v71 = vld [vmem:[#allocation5 + $0xb0] sm:$0xff]
    %v72 = vld [vmem:[#allocation5 + $0xb8] sm:$0xff]
    %v73 = vld [vmem:[#allocation5 + $0xc0] sm:$0xff]
    %v74 = vld [vmem:[#allocation5 + $0xc8] sm:$0xff]
    %v75 = vld [vmem:[#allocation5 + $0xd0] sm:$0xff]
    %v76 = vld [vmem:[#allocation5 + $0xd8] sm:$0xff]
    %v77 = vld [vmem:[#allocation5 + $0xe0] sm:$0xff]
    %v78 = vld [vmem:[#allocation5 + $0xe8] sm:$0xff]
    %v79 = vld [vmem:[#allocation5 + $0xf0] sm:$0xff]
    %v80 = vld [vmem:[#allocation5 + $0xf8] sm:$0xff]
    %v81 = vld [vmem:[#allocation5 + $0x100] sm:$0xff]
    %v82 = vld [vmem:[#allocation5 + $0x108] sm:$0xff]
    %v83 = vld [vmem:[#allocation5 + $0x110] sm:$0xff]
    %v84 = vld [vmem:[#allocation5 + $0x118] sm:$0xff]
    %v85 = vld [vmem:[#allocation5 + $0x120] sm:$0xff]
    %v86 = vld [vmem:[#allocation5 + $0x128] sm:$0xff]
    %v87 = vld [vmem:[#allocation5 + $0x130] sm:$0xff]
    %v88 = vld [vmem:[#allocation5 + $0x138] sm:$0xff]
    %v89 = vld [vmem:[#allocation5 + $0x140] sm:$0xff]
    %v90 = vld [vmem:[#allocation5 + $0x148] sm:$0xff]
    %v91 = vld [vmem:[#allocation5 + $0x150] sm:$0xff]
    %v92 = vld [vmem:[#allocation5 + $0x158] sm:$0xff]
    %v93 = vld [vmem:[#allocation5 + $0x160] sm:$0xff]
    %v94 = vld [vmem:[#allocation5 + $0x168] sm:$0xff]
    %v95 = vld [vmem:[#allocation5 + $0x170] sm:$0xff]
    %v96 = vld [vmem:[#allocation5 + $0x178] sm:$0xff]
    %v97 = vld [vmem:[#allocation5 + $0x180] sm:$0xff]
    %v98 = vld [vmem:[#allocation5 + $0x188] sm:$0xff]
    %v99 = vld [vmem:[#allocation5 + $0x190] sm:$0xff]
    %v100 = vld [vmem:[#allocation5 + $0x198] sm:$0xff]
    %v101 = vld [vmem:[#allocation5 + $0x1a0] sm:$0xff]
    %v102 = vld [vmem:[#allocation5 + $0x1a8] sm:$0xff]
    %v103 = vld [vmem:[#allocation5 + $0x1b0] sm:$0xff]
    %v104 = vld [vmem:[#allocation5 + $0x1b8] sm:$0xff]
    %v105 = vld [vmem:[#allocation5 + $0x1c0] sm:$0xff]
    %v106 = vld [vmem:[#allocation5 + $0x1c8] sm:$0xff]
    %v107 = vld [vmem:[#allocation5 + $0x1d0] sm:$0xff]
    %v108 = vld [vmem:[#allocation5 + $0x1d8] sm:$0xff]
    %v109 = vld [vmem:[#allocation5 + $0x1e0] sm:$0xff]
    %v110 = vld [vmem:[#allocation5 + $0x1e8] sm:$0xff]
    %v111 = vld [vmem:[#allocation5 + $0x1f0] sm:$0xff]
    %v112 = vld [vmem:[#allocation5 + $0x1f8] sm:$0xff]
    %v121 = vunpack.c.l.b16 %v41
    %v122 = vunpack.c.l.b16 %v42
    %v123 = vunpack.c.l.b16 %v43
    %v124 = vunpack.c.l.b16 %v44
    %v125 = vunpack.c.l.b16 %v45
    %v126 = vunpack.c.l.b16 %v46
    %v127 = vunpack.c.l.b16 %v47
    %v128 = vunpack.c.l.b16 %v48
    %v129 = vpack.c.b16 %v122, %v121
    %v130 = vpack.c.b16 %v124, %v123
    %v131 = vpack.c.b16 %v126, %v125
    %v132 = vpack.c.b16 %v128, %v127
    %v201 = vunpack.c.l.b16 %v49
    %v202 = vunpack.c.h.b16 %v49
    %v203 = vunpack.c.l.b16 %v50
    %v204 = vunpack.c.h.b16 %v50
    %v205 = vunpack.c.l.b16 %v51
    %v206 = vunpack.c.h.b16 %v51
    %v207 = vunpack.c.l.b16 %v52
    %v208 = vunpack.c.h.b16 %v52
    %v209 = vunpack.c.l.b16 %v53
    %v210 = vunpack.c.h.b16 %v53
    %v211 = vunpack.c.l.b16 %v54
    %v212 = vunpack.c.h.b16 %v54
    %v213 = vunpack.c.l.b16 %v55
    %v214 = vunpack.c.h.b16 %v55
    %v215 = vunpack.c.l.b16 %v56
    %v216 = vunpack.c.h.b16 %v56
    %v217 = vunpack.c.l.b16 %v57
    %v218 = vunpack.c.h.b16 %v57
    %v219 = vunpack.c.l.b16 %v58
    %v220 = vunpack.c.h.b16 %v58
    %v221 = vunpack.c.l.b16 %v59
    %v222 = vunpack.c.h.b16 %v59
    %v223 = vunpack.c.l.b16 %v60
    %v224 = vunpack.c.h.b16 %v60
    %v225 = vunpack.c.l.b16 %v61
    %v226 = vunpack.c.h.b16 %v61
    %v227 = vunpack.c.l.b16 %v62
    %v228 = vunpack.c.h.b16 %v62
    %v229 = vunpack.c.l.b16 %v63
    %v230 = vunpack.c.h.b16 %v63
    %v231 = vunpack.c.l.b16 %v64
    %v232 = vunpack.c.h.b16 %v64
    %v233 = vunpack.c.l.b16 %v65
    %v234 = vunpack.c.h.b16 %v65
    %v235 = vunpack.c.l.b16 %v66
    %v236 = vunpack.c.h.b16 %v66
    %v237 = vunpack.c.l.b16 %v67
    %v238 = vunpack.c.h.b16 %v67
    %v239 = vunpack.c.l.b16 %v68
    %v240 = vunpack.c.h.b16 %v68
    %v241 = vunpack.c.l.b16 %v69
    %v242 = vunpack.c.h.b16 %v69
    %v243 = vunpack.c.l.b16 %v70
    %v244 = vunpack.c.h.b16 %v70
    %v245 = vunpack.c.l.b16 %v71
    %v246 = vunpack.c.h.b16 %v71
    %v247 = vunpack.c.l.b16 %v72
    %v248 = vunpack.c.h.b16 %v72
    %v249 = vunpack.c.l.b16 %v73
    %v250 = vunpack.c.h.b16 %v73
    %v251 = vunpack.c.l.b16 %v74
    %v252 = vunpack.c.h.b16 %v74
    %v253 = vunpack.c.l.b16 %v75
    %v254 = vunpack.c.h.b16 %v75
    %v255 = vunpack.c.l.b16 %v76
    %v256 = vunpack.c.h.b16 %v76
    %v257 = vunpack.c.l.b16 %v77
    %v258 = vunpack.c.h.b16 %v77
    %v259 = vunpack.c.l.b16 %v78
    %v260 = vunpack.c.h.b16 %v78
    %v261 = vunpack.c.l.b16 %v79
    %v262 = vunpack.c.h.b16 %v79
    %v263 = vunpack.c.l.b16 %v80
    %v264 = vunpack.c.h.b16 %v80
    %v265 = vunpack.c.l.b16 %v81
    %v266 = vunpack.c.h.b16 %v81
    %v267 = vunpack.c.l.b16 %v82
    %v268 = vunpack.c.h.b16 %v82
    %v269 = vunpack.c.l.b16 %v83
    %v270 = vunpack.c.h.b16 %v83
    %v271 = vunpack.c.l.b16 %v84
    %v272 = vunpack.c.h.b16 %v84
    %v273 = vunpack.c.l.b16 %v85
    %v274 = vunpack.c.h.b16 %v85
    %v275 = vunpack.c.l.b16 %v86
    %v276 = vunpack.c.h.b16 %v86
    %v277 = vunpack.c.l.b16 %v87
    %v278 = vunpack.c.h.b16 %v87
    %v279 = vunpack.c.l.b16 %v88
    %v280 = vunpack.c.h.b16 %v88
    %v281 = vunpack.c.l.b16 %v89
    %v282 = vunpack.c.h.b16 %v89
    %v283 = vunpack.c.l.b16 %v90
    %v284 = vunpack.c.h.b16 %v90
    %v285 = vunpack.c.l.b16 %v91
    %v286 = vunpack.c.h.b16 %v91
    %v287 = vunpack.c.l.b16 %v92
    %v288 = vunpack.c.h.b16 %v92
    %v289 = vunpack.c.l.b16 %v93
    %v290 = vunpack.c.h.b16 %v93
    %v291 = vunpack.c.l.b16 %v94
    %v292 = vunpack.c.h.b16 %v94
    %v293 = vunpack.c.l.b16 %v95
    %v294 = vunpack.c.h.b16 %v95
    %v295 = vunpack.c.l.b16 %v96
    %v296 = vunpack.c.h.b16 %v96
    %v297 = vunpack.c.l.b16 %v97
    %v298 = vunpack.c.h.b16 %v97
    %v299 = vunpack.c.l.b16 %v98
    %v300 = vunpack.c.h.b16 %v98
    %v301 = vunpack.c.l.b16 %v99
    %v302 = vunpack.c.h.b16 %v99
    %v303 = vunpack.c.l.b16 %v100
    %v304 = vunpack.c.h.b16 %v100
    %v305 = vunpack.c.l.b16 %v101
    %v306 = vunpack.c.h.b16 %v101
    %v307 = vunpack.c.l.b16 %v102
    %v308 = vunpack.c.h.b16 %v102
    %v309 = vunpack.c.l.b16 %v103
    %v310 = vunpack.c.h.b16 %v103
    %v311 = vunpack.c.l.b16 %v104
    %v312 = vunpack.c.h.b16 %v104
    %v313 = vunpack.c.l.b16 %v105
    %v314 = vunpack.c.h.b16 %v105
    %v315 = vunpack.c.l.b16 %v106
    %v316 = vunpack.c.h.b16 %v106
    %v317 = vunpack.c.l.b16 %v107
    %v318 = vunpack.c.h.b16 %v107
    %v319 = vunpack.c.l.b16 %v108
    %v320 = vunpack.c.h.b16 %v108
    %v321 = vunpack.c.l.b16 %v109
    %v322 = vunpack.c.h.b16 %v109
    %v323 = vunpack.c.l.b16 %v110
    %v324 = vunpack.c.h.b16 %v110
    %v325 = vunpack.c.l.b16 %v111
    %v326 = vunpack.c.h.b16 %v111
    %v327 = vunpack.c.l.b16 %v112
    %v328 = vunpack.c.h.b16 %v112
    %v329 = vpack.c.b16 %v209, %v201
    %v330 = vpack.c.b16 %v210, %v202
    %v331 = vpack.c.b16 %v211, %v203
    %v332 = vpack.c.b16 %v212, %v204
    %v333 = vpack.c.b16 %v213, %v205
    %v334 = vpack.c.b16 %v214, %v206
    %v335 = vpack.c.b16 %v215, %v207
    %v336 = vpack.c.b16 %v216, %v208
    %v337 = vpack.c.b16 %v225, %v217
    %v338 = vpack.c.b16 %v226, %v218
    %v339 = vpack.c.b16 %v227, %v219
    %v340 = vpack.c.b16 %v228, %v220
    %v341 = vpack.c.b16 %v229, %v221
    %v342 = vpack.c.b16 %v230, %v222
    %v343 = vpack.c.b16 %v231, %v223
    %v344 = vpack.c.b16 %v232, %v224
    %v345 = vpack.c.b16 %v241, %v233
    %v346 = vpack.c.b16 %v242, %v234
    %v347 = vpack.c.b16 %v243, %v235
    %v348 = vpack.c.b16 %v244, %v236
    %v349 = vpack.c.b16 %v245, %v237
    %v350 = vpack.c.b16 %v246, %v238
    %v351 = vpack.c.b16 %v247, %v239
    %v352 = vpack.c.b16 %v248, %v240
    %v353 = vpack.c.b16 %v257, %v249
    %v354 = vpack.c.b16 %v258, %v250
    %v355 = vpack.c.b16 %v259, %v251
    %v356 = vpack.c.b16 %v260, %v252
    %v357 = vpack.c.b16 %v261, %v253
    %v358 = vpack.c.b16 %v262, %v254
    %v359 = vpack.c.b16 %v263, %v255
    %v360 = vpack.c.b16 %v264, %v256
    %v361 = vpack.c.b16 %v273, %v265
    %v362 = vpack.c.b16 %v274, %v266
    %v363 = vpack.c.b16 %v275, %v267
    %v364 = vpack.c.b16 %v276, %v268
    %v365 = vpack.c.b16 %v277, %v269
    %v366 = vpack.c.b16 %v278, %v270
    %v367 = vpack.c.b16 %v279, %v271
    %v368 = vpack.c.b16 %v280, %v272
    %v369 = vpack.c.b16 %v289, %v281
    %v370 = vpack.c.b16 %v290, %v282
    %v371 = vpack.c.b16 %v291, %v283
    %v372 = vpack.c.b16 %v292, %v284
    %v373 = vpack.c.b16 %v293, %v285
    %v374 = vpack.c.b16 %v294, %v286
    %v375 = vpack.c.b16 %v295, %v287
    %v376 = vpack.c.b16 %v296, %v288
    %v377 = vpack.c.b16 %v305, %v297
    %v378 = vpack.c.b16 %v306, %v298
    %v379 = vpack.c.b16 %v307, %v299
    %v380 = vpack.c.b16 %v308, %v300
    %v381 = vpack.c.b16 %v309, %v301
    %v382 = vpack.c.b16 %v310, %v302
    %v383 = vpack.c.b16 %v311, %v303
    %v384 = vpack.c.b16 %v312, %v304
    %v385 = vpack.c.b16 %v321, %v313
    %v386 = vpack.c.b16 %v322, %v314
    %v387 = vpack.c.b16 %v323, %v315
    %v388 = vpack.c.b16 %v324, %v316
    %v389 = vpack.c.b16 %v325, %v317
    %v390 = vpack.c.b16 %v326, %v318
    %v391 = vpack.c.b16 %v327, %v319
    %v392 = vpack.c.b16 %v328, %v320
    %457 = vmatprep.subr.bf16.mxu0 %v386
    %458 = vmatpush1.bf16.msra.mxu0 %v385
    %459 = vmatprep.subr.bf16.mxu0 %v378
    %460 = vmatpush1.bf16.msra.mxu0 %v377
    %461 = vmatprep.subr.bf16.mxu0 %v370
    %462 = vmatpush1.bf16.msra.mxu0 %v369
    %463 = vmatprep.subr.bf16.mxu0 %v362
    %464 = vmatpush1.bf16.msra.mxu0 %v361
    %465 = vmatprep.subr.bf16.mxu0 %v354
    %466 = vmatpush1.bf16.msra.mxu0 %v353
    %467 = vmatprep.subr.bf16.mxu0 %v346
    %468 = vmatpush1.bf16.msra.mxu0 %v345
    %469 = vmatprep.subr.bf16.mxu0 %v338
    %470 = vmatpush1.bf16.msra.mxu0 %v337
    %471 = vmatprep.subr.bf16.mxu0 %v330
    %472 = vmatpush1.bf16.msra.mxu0 %v329
    %473 = vmatprep.subr.bf16.mxu0 0
    %474 = vmatpush2.bf16.msra.mxu0 0
    %475 = vmatprep.subr.bf16.mxu0 0
    %476 = vmatpush2.bf16.msra.mxu0 0
    %477 = vmatprep.subr.bf16.mxu0 0
    %478 = vmatpush2.bf16.msra.mxu0 0
    %479 = vmatprep.subr.bf16.mxu0 0
    %480 = vmatpush2.bf16.msra.mxu0 0
    %481 = vmatprep.subr.bf16.mxu0 0
    %482 = vmatpush2.bf16.msra.mxu0 0
    %483 = vmatprep.subr.bf16.mxu0 0
    %484 = vmatpush2.bf16.msra.mxu0 0
    %485 = vmatprep.subr.bf16.mxu0 0
    %486 = vmatpush2.bf16.msra.mxu0 0
    %487 = vmatprep.subr.bf16.mxu0 0
    %488 = vmatpush2.bf16.msra.mxu0 0
    %489 = vmatprep.mubr.bf16.mxu0 0
    %490 = vmatmul.mubr.bf16.gmra.mxu0 %v129
    %v491 = vpop.f32.mrf.mxu0
    %v492 = vadd.f32 0.0, %v491
    %v493 = vpop.f32.mrf.mxu0
    %v494 = vadd.f32 0.0, %v493
    %v495 = vpop.f32.mrf.mxu0
    %v496 = vadd.f32 0.0, %v495
    %v497 = vpop.f32.mrf.mxu0
    %v498 = vadd.f32 0.0, %v497
    %499 = vmatprep.mubr.bf16.mxu0 0
    %500 = vmatmul.mubr.bf16.gmra.mxu0 %v130
    %v501 = vpop.f32.mrf.mxu0
    %v502 = vadd.f32 0.0, %v501
    %v503 = vpop.f32.mrf.mxu0
    %v504 = vadd.f32 0.0, %v503
    %v505 = vpop.f32.mrf.mxu0
    %v506 = vadd.f32 0.0, %v505
    %v507 = vpop.f32.mrf.mxu0
    %v508 = vadd.f32 0.0, %v507
    %509 = vmatprep.mubr.bf16.mxu0 0
    %510 = vmatmul.mubr.bf16.gmra.mxu0 %v131
    %v511 = vpop.f32.mrf.mxu0
    %v512 = vadd.f32 0.0, %v511
    %v513 = vpop.f32.mrf.mxu0
    %v514 = vadd.f32 0.0, %v513
    %v515 = vpop.f32.mrf.mxu0
    %v516 = vadd.f32 0.0, %v515
    %v517 = vpop.f32.mrf.mxu0
    %v518 = vadd.f32 0.0, %v517
    %519 = vmatprep.mubr.bf16.mxu0 0
    %520 = vmatmul.mubr.bf16.gmra.mxu0 %v132
    %v521 = vpop.f32.mrf.mxu0
    %v522 = vadd.f32 0.0, %v521
    %v523 = vpop.f32.mrf.mxu0
    %v524 = vadd.f32 0.0, %v523
    %v525 = vpop.f32.mrf.mxu0
    %v526 = vadd.f32 0.0, %v525
    %v527 = vpop.f32.mrf.mxu0
    %v528 = vadd.f32 0.0, %v527
    %529 = vdwg.mxu0
    %530 = vmatprep.subr.bf16.mxu0 %v388
    %531 = vmatpush1.bf16.msra.mxu0 %v387
    %532 = vmatprep.subr.bf16.mxu0 %v380
    %533 = vmatpush1.bf16.msra.mxu0 %v379
    %534 = vmatprep.subr.bf16.mxu0 %v372
    %535 = vmatpush1.bf16.msra.mxu0 %v371
    %536 = vmatprep.subr.bf16.mxu0 %v364
    %537 = vmatpush1.bf16.msra.mxu0 %v363
    %538 = vmatprep.subr.bf16.mxu0 %v356
    %539 = vmatpush1.bf16.msra.mxu0 %v355
    %540 = vmatprep.subr.bf16.mxu0 %v348
    %541 = vmatpush1.bf16.msra.mxu0 %v347
    %542 = vmatprep.subr.bf16.mxu0 %v340
    %543 = vmatpush1.bf16.msra.mxu0 %v339
    %544 = vmatprep.subr.bf16.mxu0 %v332
    %545 = vmatpush1.bf16.msra.mxu0 %v331
    %546 = vmatprep.subr.bf16.mxu0 0
    %547 = vmatpush2.bf16.msra.mxu0 0
    %548 = vmatprep.subr.bf16.mxu0 0
    %549 = vmatpush2.bf16.msra.mxu0 0
    %550 = vmatprep.subr.bf16.mxu0 0
    %551 = vmatpush2.bf16.msra.mxu0 0
    %552 = vmatprep.subr.bf16.mxu0 0
    %553 = vmatpush2.bf16.msra.mxu0 0
    %554 = vmatprep.subr.bf16.mxu0 0
    %555 = vmatpush2.bf16.msra.mxu0 0
    %556 = vmatprep.subr.bf16.mxu0 0
    %557 = vmatpush2.bf16.msra.mxu0 0
    %558 = vmatprep.subr.bf16.mxu0 0
    %559 = vmatpush2.bf16.msra.mxu0 0
    %560 = vmatprep.subr.bf16.mxu0 0
    %561 = vmatpush2.bf16.msra.mxu0 0
    %562 = vmatprep.mubr.bf16.mxu0 0
    %563 = vmatmul.mubr.bf16.gmra.mxu0 %v129
    %v564 = vpop.f32.mrf.mxu0
    %v565 = vadd.f32 0.0, %v564
    %v566 = vpop.f32.mrf.mxu0
    %v567 = vadd.f32 0.0, %v566
    %v568 = vpop.f32.mrf.mxu0
    %v569 = vadd.f32 0.0, %v568
    %v570 = vpop.f32.mrf.mxu0
    %v571 = vadd.f32 0.0, %v570
    %572 = vmatprep.mubr.bf16.mxu0 0
    %573 = vmatmul.mubr.bf16.gmra.mxu0 %v130
    %v574 = vpop.f32.mrf.mxu0
    %v575 = vadd.f32 0.0, %v574
    %v576 = vpop.f32.mrf.mxu0
    %v577 = vadd.f32 0.0, %v576
    %v578 = vpop.f32.mrf.mxu0
    %v579 = vadd.f32 0.0, %v578
    %v580 = vpop.f32.mrf.mxu0
    %v581 = vadd.f32 0.0, %v580
    %582 = vmatprep.mubr.bf16.mxu0 0
    %583 = vmatmul.mubr.bf16.gmra.mxu0 %v131
    %v584 = vpop.f32.mrf.mxu0
    %v585 = vadd.f32 0.0, %v584
    %v586 = vpop.f32.mrf.mxu0
    %v587 = vadd.f32 0.0, %v586
    %v588 = vpop.f32.mrf.mxu0
    %v589 = vadd.f32 0.0, %v588
    %v590 = vpop.f32.mrf.mxu0
    %v591 = vadd.f32 0.0, %v590
    %592 = vmatprep.mubr.bf16.mxu0 0
    %593 = vmatmul.mubr.bf16.gmra.mxu0 %v132
    %v594 = vpop.f32.mrf.mxu0
    %v595 = vadd.f32 0.0, %v594
    %v596 = vpop.f32.mrf.mxu0
    %v597 = vadd.f32 0.0, %v596
    %v598 = vpop.f32.mrf.mxu0
    %v599 = vadd.f32 0.0, %v598
    %v600 = vpop.f32.mrf.mxu0
    %v601 = vadd.f32 0.0, %v600
    %602 = vdwg.mxu0
    %603 = vmatprep.subr.bf16.mxu0 %v390
    %604 = vmatpush1.bf16.msra.mxu0 %v389
    %605 = vmatprep.subr.bf16.mxu0 %v382
    %606 = vmatpush1.bf16.msra.mxu0 %v381
    %607 = vmatprep.subr.bf16.mxu0 %v374
    %608 = vmatpush1.bf16.msra.mxu0 %v373
    %609 = vmatprep.subr.bf16.mxu0 %v366
    %610 = vmatpush1.bf16.msra.mxu0 %v365
    %611 = vmatprep.subr.bf16.mxu0 %v358
    %612 = vmatpush1.bf16.msra.mxu0 %v357
    %613 = vmatprep.subr.bf16.mxu0 %v350
    %614 = vmatpush1.bf16.msra.mxu0 %v349
    %615 = vmatprep.subr.bf16.mxu0 %v342
    %616 = vmatpush1.bf16.msra.mxu0 %v341
    %617 = vmatprep.subr.bf16.mxu0 %v334
    %618 = vmatpush1.bf16.msra.mxu0 %v333
    %619 = vmatprep.subr.bf16.mxu0 0
    %620 = vmatpush2.bf16.msra.mxu0 0
    %621 = vmatprep.subr.bf16.mxu0 0
    %622 = vmatpush2.bf16.msra.mxu0 0
    %623 = vmatprep.subr.bf16.mxu0 0
    %624 = vmatpush2.bf16.msra.mxu0 0
    %625 = vmatprep.subr.bf16.mxu0 0
    %626 = vmatpush2.bf16.msra.mxu0 0
    %627 = vmatprep.subr.bf16.mxu0 0
    %628 = vmatpush2.bf16.msra.mxu0 0
    %629 = vmatprep.subr.bf16.mxu0 0
    %630 = vmatpush2.bf16.msra.mxu0 0
    %631 = vmatprep.subr.bf16.mxu0 0
    %632 = vmatpush2.bf16.msra.mxu0 0
    %633 = vmatprep.subr.bf16.mxu0 0
    %634 = vmatpush2.bf16.msra.mxu0 0
    %635 = vmatprep.mubr.bf16.mxu0 0
    %636 = vmatmul.mubr.bf16.gmra.mxu0 %v129
    %v637 = vpop.f32.mrf.mxu0
    %v638 = vadd.f32 0.0, %v637
    %v639 = vpop.f32.mrf.mxu0
    %v640 = vadd.f32 0.0, %v639
    %v641 = vpop.f32.mrf.mxu0
    %v642 = vadd.f32 0.0, %v641
    %v643 = vpop.f32.mrf.mxu0
    %v644 = vadd.f32 0.0, %v643
    %645 = vmatprep.mubr.bf16.mxu0 0
    %646 = vmatmul.mubr.bf16.gmra.mxu0 %v130
    %v647 = vpop.f32.mrf.mxu0
    %v648 = vadd.f32 0.0, %v647
    %v649 = vpop.f32.mrf.mxu0
    %v650 = vadd.f32 0.0, %v649
    %v651 = vpop.f32.mrf.mxu0
    %v652 = vadd.f32 0.0, %v651
    %v653 = vpop.f32.mrf.mxu0
    %v654 = vadd.f32 0.0, %v653
    %655 = vmatprep.mubr.bf16.mxu0 0
    %656 = vmatmul.mubr.bf16.gmra.mxu0 %v131
    %v657 = vpop.f32.mrf.mxu0
    %v658 = vadd.f32 0.0, %v657
    %v659 = vpop.f32.mrf.mxu0
    %v660 = vadd.f32 0.0, %v659
    %v661 = vpop.f32.mrf.mxu0
    %v662 = vadd.f32 0.0, %v661
    %v663 = vpop.f32.mrf.mxu0
    %v664 = vadd.f32 0.0, %v663
    %665 = vmatprep.mubr.bf16.mxu0 0
    %666 = vmatmul.mubr.bf16.gmra.mxu0 %v132
    %v667 = vpop.f32.mrf.mxu0
    %v668 = vadd.f32 0.0, %v667
    %v669 = vpop.f32.mrf.mxu0
    %v670 = vadd.f32 0.0, %v669
    %v671 = vpop.f32.mrf.mxu0
    %v672 = vadd.f32 0.0, %v671
    %v673 = vpop.f32.mrf.mxu0
    %v674 = vadd.f32 0.0, %v673
    %675 = vdwg.mxu0
    %676 = vmatprep.subr.bf16.mxu0 %v392
    %677 = vmatpush1.bf16.msra.mxu0 %v391
    %678 = vmatprep.subr.bf16.mxu0 %v384
    %679 = vmatpush1.bf16.msra.mxu0 %v383
    %680 = vmatprep.subr.bf16.mxu0 %v376
    %681 = vmatpush1.bf16.msra.mxu0 %v375
    %682 = vmatprep.subr.bf16.mxu0 %v368
    %683 = vmatpush1.bf16.msra.mxu0 %v367
    %684 = vmatprep.subr.bf16.mxu0 %v360
    %685 = vmatpush1.bf16.msra.mxu0 %v359
    %686 = vmatprep.subr.bf16.mxu0 %v352
    %687 = vmatpush1.bf16.msra.mxu0 %v351
    %688 = vmatprep.subr.bf16.mxu0 %v344
    %689 = vmatpush1.bf16.msra.mxu0 %v343
    %690 = vmatprep.subr.bf16.mxu0 %v336
    %691 = vmatpush1.bf16.msra.mxu0 %v335
    %692 = vmatprep.subr.bf16.mxu0 0
    %693 = vmatpush2.bf16.msra.mxu0 0
    %694 = vmatprep.subr.bf16.mxu0 0
    %695 = vmatpush2.bf16.msra.mxu0 0
    %696 = vmatprep.subr.bf16.mxu0 0
    %697 = vmatpush2.bf16.msra.mxu0 0
    %698 = vmatprep.subr.bf16.mxu0 0
    %699 = vmatpush2.bf16.msra.mxu0 0
    %700 = vmatprep.subr.bf16.mxu0 0
    %701 = vmatpush2.bf16.msra.mxu0 0
    %702 = vmatprep.subr.bf16.mxu0 0
    %703 = vmatpush2.bf16.msra.mxu0 0
    %704 = vmatprep.subr.bf16.mxu0 0
    %705 = vmatpush2.bf16.msra.mxu0 0
    %706 = vmatprep.subr.bf16.mxu0 0
    %707 = vmatpush2.bf16.msra.mxu0 0
    %708 = vmatprep.mubr.bf16.mxu0 0
    %709 = vmatmul.mubr.bf16.gmra.mxu0 %v129
    %v710 = vpop.f32.mrf.mxu0
    %v711 = vadd.f32 0.0, %v710
    %v712 = vpop.f32.mrf.mxu0
    %v713 = vadd.f32 0.0, %v712
    %v714 = vpop.f32.mrf.mxu0
    %v715 = vadd.f32 0.0, %v714
    %v716 = vpop.f32.mrf.mxu0
    %v717 = vadd.f32 0.0, %v716
    %718 = vmatprep.mubr.bf16.mxu0 0
    %719 = vmatmul.mubr.bf16.gmra.mxu0 %v130
    %v720 = vpop.f32.mrf.mxu0
    %v721 = vadd.f32 0.0, %v720
    %v722 = vpop.f32.mrf.mxu0
    %v723 = vadd.f32 0.0, %v722
    %v724 = vpop.f32.mrf.mxu0
    %v725 = vadd.f32 0.0, %v724
    %v726 = vpop.f32.mrf.mxu0
    %v727 = vadd.f32 0.0, %v726
    %728 = vmatprep.mubr.bf16.mxu0 0
    %729 = vmatmul.mubr.bf16.gmra.mxu0 %v131
    %v730 = vpop.f32.mrf.mxu0
    %v731 = vadd.f32 0.0, %v730
    %v732 = vpop.f32.mrf.mxu0
    %v733 = vadd.f32 0.0, %v732
    %v734 = vpop.f32.mrf.mxu0
    %v735 = vadd.f32 0.0, %v734
    %v736 = vpop.f32.mrf.mxu0
    %v737 = vadd.f32 0.0, %v736
    %738 = vmatprep.mubr.bf16.mxu0 0
    %739 = vmatmul.mubr.bf16.gmra.mxu0 %v132
    %v740 = vpop.f32.mrf.mxu0
    %v741 = vadd.f32 0.0, %v740
    %v742 = vpop.f32.mrf.mxu0
    %v743 = vadd.f32 0.0, %v742
    %v744 = vpop.f32.mrf.mxu0
    %v745 = vadd.f32 0.0, %v744
    %v746 = vpop.f32.mrf.mxu0
    %v747 = vadd.f32 0.0, %v746
    %748 = vdwg.mxu0
    %749 = vst [vmem:[#allocation7] sm:$0xff] %v492
    %750 = vst [vmem:[#allocation7 + $0x8] sm:$0xff] %v494
    %751 = vst [vmem:[#allocation7 + $0x10] sm:$0xff] %v565
    %752 = vst [vmem:[#allocation7 + $0x18] sm:$0xff] %v567
    %753 = vst [vmem:[#allocation7 + $0x20] sm:$0xff] %v638
    %754 = vst [vmem:[#allocation7 + $0x28] sm:$0xff] %v640
    %755 = vst [vmem:[#allocation7 + $0x30] sm:$0xff] %v711
    %756 = vst [vmem:[#allocation7 + $0x38] sm:$0xff] %v713
    %757 = vst [vmem:[#allocation7 + $0x40] sm:$0xff] %v496
    %758 = vst [vmem:[#allocation7 + $0x48] sm:$0xff] %v498
    %759 = vst [vmem:[#allocation7 + $0x50] sm:$0xff] %v569
    %760 = vst [vmem:[#allocation7 + $0x58] sm:$0xff] %v571
    %761 = vst [vmem:[#allocation7 + $0x60] sm:$0xff] %v642
    %762 = vst [vmem:[#allocation7 + $0x68] sm:$0xff] %v644
    %763 = vst [vmem:[#allocation7 + $0x70] sm:$0xff] %v715
    %764 = vst [vmem:[#allocation7 + $0x78] sm:$0xff] %v717
    %765 = vst [vmem:[#allocation7 + $0x80] sm:$0xff] %v502
    %766 = vst [vmem:[#allocation7 + $0x88] sm:$0xff] %v504
    %767 = vst [vmem:[#allocation7 + $0x90] sm:$0xff] %v575
    %768 = vst [vmem:[#allocation7 + $0x98] sm:$0xff] %v577
    %769 = vst [vmem:[#allocation7 + $0xa0] sm:$0xff] %v648
    %770 = vst [vmem:[#allocation7 + $0xa8] sm:$0xff] %v650
    %771 = vst [vmem:[#allocation7 + $0xb0] sm:$0xff] %v721
    %772 = vst [vmem:[#allocation7 + $0xb8] sm:$0xff] %v723
    %773 = vst [vmem:[#allocation7 + $0xc0] sm:$0xff] %v506
    %774 = vst [vmem:[#allocation7 + $0xc8] sm:$0xff] %v508
    %775 = vst [vmem:[#allocation7 + $0xd0] sm:$0xff] %v579
    %776 = vst [vmem:[#allocation7 + $0xd8] sm:$0xff] %v581
    %777 = vst [vmem:[#allocation7 + $0xe0] sm:$0xff] %v652
    %778 = vst [vmem:[#allocation7 + $0xe8] sm:$0xff] %v654
    %779 = vst [vmem:[#allocation7 + $0xf0] sm:$0xff] %v725
    %780 = vst [vmem:[#allocation7 + $0xf8] sm:$0xff] %v727
    %781 = vst [vmem:[#allocation7 + $0x100] sm:$0xff] %v512
    %782 = vst [vmem:[#allocation7 + $0x108] sm:$0xff] %v514
    %783 = vst [vmem:[#allocation7 + $0x110] sm:$0xff] %v585
    %784 = vst [vmem:[#allocation7 + $0x118] sm:$0xff] %v587
    %785 = vst [vmem:[#allocation7 + $0x120] sm:$0xff] %v658
    %786 = vst [vmem:[#allocation7 + $0x128] sm:$0xff] %v660
    %787 = vst [vmem:[#allocation7 + $0x130] sm:$0xff] %v731
    %788 = vst [vmem:[#allocation7 + $0x138] sm:$0xff] %v733
    %789 = vst [vmem:[#allocation7 + $0x140] sm:$0xff] %v516
    %790 = vst [vmem:[#allocation7 + $0x148] sm:$0xff] %v518
    %791 = vst [vmem:[#allocation7 + $0x150] sm:$0xff] %v589
    %792 = vst [vmem:[#allocation7 + $0x158] sm:$0xff] %v591
    %793 = vst [vmem:[#allocation7 + $0x160] sm:$0xff] %v662
    %794 = vst [vmem:[#allocation7 + $0x168] sm:$0xff] %v664
    %795 = vst [vmem:[#allocation7 + $0x170] sm:$0xff] %v735
    %796 = vst [vmem:[#allocation7 + $0x178] sm:$0xff] %v737
    %797 = vst [vmem:[#allocation7 + $0x180] sm:$0xff] %v522
    %798 = vst [vmem:[#allocation7 + $0x188] sm:$0xff] %v524
    %799 = vst [vmem:[#allocation7 + $0x190] sm:$0xff] %v595
    %800 = vst [vmem:[#allocation7 + $0x198] sm:$0xff] %v597
    %801 = vst [vmem:[#allocation7 + $0x1a0] sm:$0xff] %v668
    %802 = vst [vmem:[#allocation7 + $0x1a8] sm:$0xff] %v670
    %803 = vst [vmem:[#allocation7 + $0x1b0] sm:$0xff] %v741
    %804 = vst [vmem:[#allocation7 + $0x1b8] sm:$0xff] %v743
    %805 = vst [vmem:[#allocation7 + $0x1c0] sm:$0xff] %v526
    %806 = vst [vmem:[#allocation7 + $0x1c8] sm:$0xff] %v528
    %807 = vst [vmem:[#allocation7 + $0x1d0] sm:$0xff] %v599
    %808 = vst [vmem:[#allocation7 + $0x1d8] sm:$0xff] %v601
    %809 = vst [vmem:[#allocation7 + $0x1e0] sm:$0xff] %v672
    %810 = vst [vmem:[#allocation7 + $0x1e8] sm:$0xff] %v674
    %811 = vst [vmem:[#allocation7 + $0x1f0] sm:$0xff] %v745
    %812 = vst [vmem:[#allocation7 + $0x1f8] sm:$0xff] %v747
    // Predicated region
    $region18: #{tpu_custom_call.1} parent=1 // pred_check
      _
    $region19: #{tpu_custom_call.1} parent=1 // pred_check_branch
      %814 = sbr.rel (0) target = $region21
    $region20: #{tpu_custom_call.1} parent=1 // pred_region
      %s816 = ssub.s32 8192, 8192
      %817 = vsyncadd [#allocation4], %s816
      %s818 = sshll.u32 [#allocation7], 4
      %s819 = int_to_ptr.vmem [resolvable:$true] %s818
      %824 = dma.vmem_to_hbm [thread:$0]  %s819, 8192, %s2, [#allocation4], 1024, 1024, 64
    $region21: #{tpu_custom_call.1} parent=1 // pred_fallthru
      _
    // Predicated region
    $region22: #{tpu_custom_call.1} parent=1 // pred_check
      _
    $region23: #{tpu_custom_call.1} parent=1 // pred_check_branch
      %826 = sbr.rel (0) target = $region25
    $region24: #{tpu_custom_call.1} parent=1 // pred_region
      %827 = dma.done [#allocation4], 8192
    $region25: #{tpu_custom_call.1} parent=1 // pred_fallthru
      _
    %828 = vsyncpa [#allocation3], 1
    %829 = vsyncpa [#allocation6], 1
    %830 = vsyncpa [#allocation4], 1

</llo_original>
